<compile_context>
chip_gen: v6e
topology: v6e:2x2x1
jax: 0.10.0
libtpu: 0.0.40
codegen_flags: <defaults>
</compile_context>

<pallas_src>
import jax
import jax.numpy as jnp
from jax.experimental import pallas as pl
from jax.experimental.pallas import tpu as pltpu


def make_hadamard(n: int, dtype=jnp.float32) -> jnp.ndarray:
    """Sylvester-construction Hadamard matrix (same as scipy.linalg.hadamard)."""
    assert n > 0 and (n & (n - 1)) == 0, "input_dim must be a power of 2"
    h = jnp.array([[1.0]], dtype=jnp.float32)
    while h.shape[0] < n:
        h = jnp.block([[h, h], [h, -h]])
    return h.astype(dtype)


def _round_up(x: int, m: int) -> int:
    return ((x + m - 1) // m) * m


def _cdiv(a: int, b: int) -> int:
    return -(-a // b)


def _vmem_capacity_bytes() -> int:
    """Physical VMEM per TensorCore; conservative (v7x-sized) fallback."""
    try:
        return int(pltpu.get_tpu_info().vmem_capacity_bytes)
    except Exception:
        return 64 * 1024 * 1024


def _device_kind() -> str:
    try:
        return jax.devices()[0].device_kind.lower()
    except Exception:
        return ""


# ---------------------------------------------------------------------------
# Kernels
# ---------------------------------------------------------------------------
def _hadamard_matmul_kernel(x_ref, h_ref, o_ref):
    # Full-K per step: one MXU pass, f32 accumulation, store in caller dtype.
    o_ref[...] = jnp.dot(
        x_ref[...], h_ref[...], preferred_element_type=jnp.float32
    ).astype(o_ref.dtype)


def _hadamard_matmul_ktiled_kernel(x_ref, h_ref, o_ref, acc_ref):
    # K-tiled reduction path (very large D): f32 accumulator resident across k.
    @pl.when(pl.program_id(2) == 0)
    def _():
        acc_ref[...] = jnp.zeros_like(acc_ref)

    acc_ref[...] += jnp.dot(
        x_ref[...], h_ref[...], preferred_element_type=jnp.float32
    )

    @pl.when(pl.program_id(2) == pl.num_programs(2) - 1)
    def _():
        o_ref[...] = acc_ref[...].astype(o_ref.dtype)


# ---------------------------------------------------------------------------
# Wrapper
# ---------------------------------------------------------------------------
def hadamard_transform_matmul(x: jnp.ndarray, hadamard: jnp.ndarray) -> jnp.ndarray:
    """Computes x @ hadamard with a Pallas TPU kernel.  x: [..., D], hadamard: [D, D]."""
    d = int(hadamard.shape[0])
    assert hadamard.shape == (d, d), "hadamard must be square"
    assert x.shape[-1] == d, "last dim of x must match Hadamard size"
    assert d > 0 and (d & (d - 1)) == 0, "input_dim must be a power of 2"

    orig_shape = x.shape
    if not jnp.issubdtype(x.dtype, jnp.floating):
        # PyTorch rejects int @ float; promote to f32 (the parameter's dtype).
        x = x.astype(jnp.float32)
    cdt = x.dtype                              # compute & output dtype (bf16 exact for +-1 H)
    itemsize = jnp.dtype(cdt).itemsize

    x2 = x.reshape(-1, d)
    m = x2.shape[0]
    if m == 0:                                 # empty batch: nothing to compute
        return x.reshape(orig_shape)

    # ---- generation-aware VMEM budgets --------------------------------------
    vmem_cap = _vmem_capacity_bytes()
    if vmem_cap >= 96 * 1024 * 1024:           # v5e / v6e: 128 MiB physical VMEM
        data_budget = 56 * 1024 * 1024
        vmem_limit = 80 * 1024 * 1024
    else:                                      # v7x (64 MiB) or unknown: conservative
        data_budget = 28 * 1024 * 1024
        vmem_limit = 48 * 1024 * 1024

    # ---- fold small D into a lane/MXU-dense width (pad-free) ----------------
    # H_eff = kron(I_fold, H) is still exactly +-1; x [M, D] -> [M/fold, fold*D]
    # is a pure contiguous reshape because fold is chosen to divide M exactly.
    kind = _device_kind()
    is_v5e = ("v5e" in kind) or ("v5 lite" in kind) or ("v5lite" in kind)
    # v5e MXU is 128 wide and f32 throughput is low: avoid over-folding there.
    lane_target = 128 if (is_v5e and cdt == jnp.float32 and d <= 128) else 256

    fold = 1
    if d < lane_target:
        max_fold = lane_target // d
        while fold < max_fold and m % (2 * fold) == 0:
            fold *= 2
    if fold > 1:
        d_eff = fold * d
        h_eff = jnp.kron(jnp.eye(fold, dtype=jnp.float32),
                         hadamard.astype(jnp.float32)).astype(cdt)
        x_in = x2.reshape(-1, d_eff)           # view, no data movement
    else:
        d_eff = d
        h_eff = hadamard.astype(cdt)
        x_in = x2
    m_fold = m // fold

    # ---- tiling --------------------------------------------------------------
    sub = max(8, 32 // itemsize)               # sublane multiple: 8 (f32) / 16 (bf16)
    tn = min(d_eff, 512)                       # never drop below 256-wide MXU passes
    n_col = d_eff // tn

    # K-tiling only when the full-K Hadamard tile would eat the VMEM budget
    # (extremely large D); tn stays MXU-dense and the H tile stays bounded.
    tk = d_eff
    h_cap = data_budget // 3
    while tk > 512 and tk * tn * itemsize > h_cap:
        tk //= 2
    n_k = d_eff // tk
    h_tile_bytes = tk * tn * itemsize

    # Single-buffer large H tiles: their DMA is the dominant traffic anyway and
    # the reclaimed VMEM goes straight into a larger row tile (matters on v7x).
    # Small tiles keep default double-buffering (and when n_col == n_k == 1 the
    # block index is constant, so Pallas only fetches H once regardless).
    h_single = h_tile_bytes >= 4 * 1024 * 1024
    h_bytes_total = (1 if h_single else 2) * h_tile_bytes

    per_row_bytes = 2 * (tk + tn) * itemsize + (4 * tn if n_k > 1 else 0)
    tm_cap = max(sub, (data_budget - h_bytes_total) // per_row_bytes)
    tm = min(4096, int(tm_cap))
    tm = max(sub, (tm // sub) * sub)
    if m_fold > sub:
        # v7x megacore: guarantee at least two row tiles so both TCs get work.
        tm = min(tm, _round_up(_cdiv(m_fold, 2), sub))
    if tm >= m_fold:
        tm = m_fold                            # single full-coverage row tile
    n_row = _cdiv(m_fold, tm)                  # ragged tail handled in-kernel (no pad)

    def _h_spec(block_shape, index_map):
        if h_single:
            try:
                return pl.BlockSpec(block_shape, index_map,
                                    pipeline_mode=pl.Buffered(1))
            except Exception:                  # pipeline_mode unavailable: fall back
                return pl.BlockSpec(block_shape, index_map)
        return pl.BlockSpec(block_shape, index_map)

    if n_k == 1:
        grid = (n_row, n_col)
        in_specs = [
            pl.BlockSpec((tm, d_eff), lambda i, j: (i, 0)),    # x row tile (full K)
            _h_spec((d_eff, tn), lambda i, j: (0, j)),          # Hadamard column tile
        ]
        out_specs = pl.BlockSpec((tm, tn), lambda i, j: (i, j))
        scratch = []
        kernel = _hadamard_matmul_kernel
        dimsem = ("parallel", "arbitrary")                      # shard rows only (v7x)
    else:
        grid = (n_row, n_col, n_k)                              # reduction axis last
        in_specs = [
            pl.BlockSpec((tm, tk), lambda i, j, k: (i, k)),
            _h_spec((tk, tn), lambda i, j, k: (k, j)),
        ]
        out_specs = pl.BlockSpec((tm, tn), lambda i, j, k: (i, j))
        scratch = [pltpu.VMEM((tm, tn), jnp.float32)]
        kernel = _hadamard_matmul_ktiled_kernel
        dimsem = ("parallel", "arbitrary", "arbitrary")

    out = pl.pallas_call(
        kernel,
        out_shape=jax.ShapeDtypeStruct((m_fold, d_eff), cdt),
        grid_spec=pltpu.PrefetchScalarGridSpec(
            num_scalar_prefetch=0,
            grid=grid,
            in_specs=in_specs,
            out_specs=out_specs,
            scratch_shapes=scratch,
        ),
        compiler_params=pltpu.CompilerParams(
            dimension_semantics=dimsem,
            vmem_limit_bytes=vmem_limit,
        ),
    )(x_in, h_eff)

    # (m_fold, d_eff) -> (..., d) is a contiguous reinterpretation: no copies.
    return out.reshape(orig_shape)


if __name__ == "__main__":
    # Deterministic setup matching the module: input_dim=32, batch=2, seq=8 (f32).
    input_dim = 32
    key = jax.random.PRNGKey(0)
    x = jax.random.normal(key, (2, 8, input_dim), dtype=jnp.float32)
    H = make_hadamard(input_dim, dtype=jnp.float32)

    y = jax.block_until_ready(hadamard_transform_matmul(x, H))
    y_ref = x @ H
    assert y.shape == x.shape and y.dtype == x.dtype
    assert jnp.allclose(y, y_ref, atol=1e-4, rtol=1e-4), "f32 mismatch vs reference"

    # bf16 input with a batch that is neither tile- nor fold-aligned
    # (exercises the pad-free ragged row-tile path and dtype preservation).
    xb = jax.random.normal(jax.random.PRNGKey(1), (3, 50, 64), dtype=jnp.bfloat16)
    Hb = make_hadamard(64, dtype=jnp.float32)
    yb = jax.block_until_ready(hadamard_transform_matmul(xb, Hb))
    yb_ref = (xb.astype(jnp.float32) @ Hb).astype(jnp.bfloat16)
    assert yb.shape == xb.shape and yb.dtype == jnp.bfloat16
    assert jnp.allclose(
        yb.astype(jnp.float32), yb_ref.astype(jnp.float32), atol=1e-1, rtol=2e-2
    ), "bf16 mismatch vs reference"

    # Odd flattened batch: fold falls back cleanly, still pad/slice-free.
    xo = jax.random.normal(jax.random.PRNGKey(2), (7, input_dim), dtype=jnp.float32)
    yo = jax.block_until_ready(hadamard_transform_matmul(xo, H))
    assert jnp.allclose(yo, xo @ H, atol=1e-4, rtol=1e-4), "odd-batch mismatch"

    print("KERNEL_OK")
</pallas_src>

<mosaic_0001>
module attributes {stable_mosaic.version = 11 : i64} {
  func.func @_hadamard_matmul_kernel(%arg0: i32, %arg1: i32, %arg2: memref<2x256xf32, #tpu.memory_space<vmem>>, %arg3: memref<256x256xf32, #tpu.memory_space<vmem>>, %arg4: memref<2x256xf32, #tpu.memory_space<vmem>>) attributes {dimension_semantics = [#tpu.dimension_semantics<parallel>, #tpu.dimension_semantics<arbitrary>], iteration_bounds = array<i64: 1, 1>, scalar_prefetch = 0 : i64, scratch_operands = 0 : i64, tpu.core_type = #tpu.core_type<tc>, window_params = [{transform_indices = @transform_0, window_bounds = array<i64: 2, 256>}, {transform_indices = @transform_1, window_bounds = array<i64: 256, 256>}, {transform_indices = @transform_2, window_bounds = array<i64: 2, 256>}]} {
    %c0 = arith.constant 0 : index
    %c0_0 = arith.constant 0 : index
    %0 = vector.load %arg2[%c0, %c0_0] : memref<2x256xf32, #tpu.memory_space<vmem>>, vector<2x256xf32>
    %c0_1 = arith.constant 0 : index
    %c0_2 = arith.constant 0 : index
    %1 = vector.load %arg3[%c0_1, %c0_2] : memref<256x256xf32, #tpu.memory_space<vmem>>, vector<256x256xf32>
    %cst = arith.constant dense<0.000000e+00> : vector<2x256xf32>
    %2 = tpu.matmul %0, %1, %cst {dimension_numbers = #tpu.dot_dimension_numbers<[1], [0], [0], [1], [0, 0, 1, 1], [], []>} : vector<2x256xf32>, vector<256x256xf32>, vector<2x256xf32> -> vector<2x256xf32>
    %c0_3 = arith.constant 0 : index
    %c0_4 = arith.constant 0 : index
    %3 = vector.load %arg4[%c0_3, %c0_4] : memref<2x256xf32, #tpu.memory_space<vmem>>, vector<2x256xf32>
    tpu.vector_store %arg4[%c0_3, %c0_4], %2 {strides = array<i32>} : memref<2x256xf32, #tpu.memory_space<vmem>>, vector<2x256xf32>,
    return
  }
  func.func @transform_0(%arg0: i32, %arg1: i32) -> (i32, i32) {
    %c0_i32 = arith.constant 0 : i32
    %c0_i32_0 = arith.constant 0 : i32
    return %arg0, %c0_i32 : i32, i32
  }
  func.func @transform_1(%arg0: i32, %arg1: i32) -> (i32, i32) {
    %c0_i32 = arith.constant 0 : i32
    %c0_i32_0 = arith.constant 0 : i32
    return %c0_i32, %arg1 : i32, i32
  }
  func.func @transform_2(%arg0: i32, %arg1: i32) -> (i32, i32) {
    %c0_i32 = arith.constant 0 : i32
    return %arg0, %arg1 : i32, i32
  }
}

</mosaic_0001>

<llo_original>
// kernel: tpu_custom_call.1
$region0: #{tpu_custom_call.1}
  #allocation0 [shape = 'u32[]', space=smem, size = 0x4, offset = 0x4, fixed_abs, tag = 'smem constant byte address 0x4 - core index']
  #allocation1 [shape = 'u32[144,128]{1,0:T(1,128)}', space=vmem, size = 0x12000, scoped, tag = 'internal scratch']
  %s0 = inlined_call_operand.hbm [shape: f32[2,256], index: 0, kind: input, shape index: {}]
  %s1 = inlined_call_operand.hbm [shape: f32[256,256], index: 1, kind: input, shape index: {}]
  %s2 = inlined_call_operand.hbm [shape: f32[2,256], index: 2, kind: output, shape index: {}]
  %s3 = sld [smem:[#allocation0]]
  $region26: #{tpu_custom_call.1} parent=0
    _
  %s5 = ssub.s32 1, %s3
  %s6 = scalar_select 0, %s5, %s3
  $region1: #{tpu_custom_call.1} parent=0
    #allocation2 [shape = 'u8[2048]{0}', space=vmem, size = 0x800, scoped, tag = 'input window, operand 0, single buffered']
    #allocation3 [shape = 's32[1]{0}', space=sflag, size = 0x4, scoped, tag = 'scoped memory for tpu_custom_call.1']
    #allocation4 [shape = 's32[1]{0}', space=sflag, size = 0x4, scoped, tag = 'scoped memory for tpu_custom_call.1']
    #allocation5 [shape = 'u8[262144]{0}', space=vmem, size = 0x40000, scoped, tag = 'input window, operand 1, single buffered']
    #allocation6 [shape = 's32[1]{0}', space=sflag, size = 0x4, scoped, tag = 'scoped memory for tpu_custom_call.1']
    #allocation7 [shape = 'u8[2048]{0}', space=vmem, size = 0x800, scoped, tag = 'output window, operand 0, single buffered']
    %7 = vsyncpa [#allocation3], 0
    %8 = vsyncpa [#allocation6], 0
    %9 = vsyncpa [#allocation4], 0
    // Predicated region
    $region2: #{tpu_custom_call.1} parent=1 // pred_check
      _
    $region3: #{tpu_custom_call.1} parent=1 // pred_check_branch
      %11 = sbr.rel (0) target = $region5
    $region4: #{tpu_custom_call.1} parent=1 // pred_region
      %s13 = ssub.s32 64, 64
      %14 = vsyncadd [#allocation3], %s13
      %s16 = sshll.u32 [#allocation2], 4
      %s17 = int_to_ptr.vmem [resolvable:$true] %s16
      %19 = dma.hbm_to_vmem [thread:$0]  %s0, 64, %s17, [#allocation3]
    $region5: #{tpu_custom_call.1} parent=1 // pred_fallthru
      _
    // Predicated region
    $region6: #{tpu_custom_call.1} parent=1 // pred_check
      _
    $region7: #{tpu_custom_call.1} parent=1 // pred_check_branch
      %21 = sbr.rel (0) target = $region9
    $region8: #{tpu_custom_call.1} parent=1 // pred_region
      %s23 = ssub.s32 8192, 8192
      %24 = vsyncadd [#allocation6], %s23
      %s25 = sshll.u32 [#allocation5], 4
      %s26 = int_to_ptr.vmem [resolvable:$true] %s25
      %31 = dma.hbm_to_vmem [thread:$0]  %s1, 8192, %s26, [#allocation6], 256, 256, 16
    $region9: #{tpu_custom_call.1} parent=1 // pred_fallthru
      _
    // Predicated region
    $region10: #{tpu_custom_call.1} parent=1 // pred_check
      _
    $region11: #{tpu_custom_call.1} parent=1 // pred_check_branch
      %33 = sbr.rel (0) target = $region13
    $region12: #{tpu_custom_call.1} parent=1 // pred_region
      %34 = dma.done [#allocation3], 64
    $region13: #{tpu_custom_call.1} parent=1 // pred_fallthru
      _
    // Predicated region
    $region14: #{tpu_custom_call.1} parent=1 // pred_check
      _
    $region15: #{tpu_custom_call.1} parent=1 // pred_check_branch
      %36 = sbr.rel (0) target = $region17
    $region16: #{tpu_custom_call.1} parent=1 // pred_region
      %37 = dma.done [#allocation6], 8192
    $region17: #{tpu_custom_call.1} parent=1 // pred_fallthru
      _
    %v38 = vld [vmem:[#allocation2] sm:$0xf]
    %v39 = vld [vmem:[#allocation5] sm:$0xff]
    %v40 = vld [vmem:[#allocation5 + $0x8] sm:$0xff]
    %v41 = vld [vmem:[#allocation5 + $0x10] sm:$0xff]
    %v42 = vld [vmem:[#allocation5 + $0x18] sm:$0xff]
    %v43 = vld [vmem:[#allocation5 + $0x20] sm:$0xff]
    %v44 = vld [vmem:[#allocation5 + $0x28] sm:$0xff]
    %v45 = vld [vmem:[#allocation5 + $0x30] sm:$0xff]
    %v46 = vld [vmem:[#allocation5 + $0x38] sm:$0xff]
    %v47 = vld [vmem:[#allocation5 + $0x40] sm:$0xff]
    %v48 = vld [vmem:[#allocation5 + $0x48] sm:$0xff]
    %v49 = vld [vmem:[#allocation5 + $0x50] sm:$0xff]
    %v50 = vld [vmem:[#allocation5 + $0x58] sm:$0xff]
    %v51 = vld [vmem:[#allocation5 + $0x60] sm:$0xff]
    %v52 = vld [vmem:[#allocation5 + $0x68] sm:$0xff]
    %v53 = vld [vmem:[#allocation5 + $0x70] sm:$0xff]
    %v54 = vld [vmem:[#allocation5 + $0x78] sm:$0xff]
    %v55 = vld [vmem:[#allocation5 + $0x80] sm:$0xff]
    %v56 = vld [vmem:[#allocation5 + $0x88] sm:$0xff]
    %v57 = vld [vmem:[#allocation5 + $0x90] sm:$0xff]
    %v58 = vld [vmem:[#allocation5 + $0x98] sm:$0xff]
    %v59 = vld [vmem:[#allocation5 + $0xa0] sm:$0xff]
    %v60 = vld [vmem:[#allocation5 + $0xa8] sm:$0xff]
    %v61 = vld [vmem:[#allocation5 + $0xb0] sm:$0xff]
    %v62 = vld [vmem:[#allocation5 + $0xb8] sm:$0xff]
    %v63 = vld [vmem:[#allocation5 + $0xc0] sm:$0xff]
    %v64 = vld [vmem:[#allocation5 + $0xc8] sm:$0xff]
    %v65 = vld [vmem:[#allocation5 + $0xd0] sm:$0xff]
    %v66 = vld [vmem:[#allocation5 + $0xd8] sm:$0xff]
    %v67 = vld [vmem:[#allocation5 + $0xe0] sm:$0xff]
    %v68 = vld [vmem:[#allocation5 + $0xe8] sm:$0xff]
    %v69 = vld [vmem:[#allocation5 + $0xf0] sm:$0xff]
    %v70 = vld [vmem:[#allocation5 + $0xf8] sm:$0xff]
    %v71 = vld [vmem:[#allocation5 + $0x100] sm:$0xff]
    %v72 = vld [vmem:[#allocation5 + $0x108] sm:$0xff]
    %v73 = vld [vmem:[#allocation5 + $0x110] sm:$0xff]
    %v74 = vld [vmem:[#allocation5 + $0x118] sm:$0xff]
    %v75 = vld [vmem:[#allocation5 + $0x120] sm:$0xff]
    %v76 = vld [vmem:[#allocation5 + $0x128] sm:$0xff]
    %v77 = vld [vmem:[#allocation5 + $0x130] sm:$0xff]
    %v78 = vld [vmem:[#allocation5 + $0x138] sm:$0xff]
    %v79 = vld [vmem:[#allocation5 + $0x140] sm:$0xff]
    %v80 = vld [vmem:[#allocation5 + $0x148] sm:$0xff]
    %v81 = vld [vmem:[#allocation5 + $0x150] sm:$0xff]
    %v82 = vld [vmem:[#allocation5 + $0x158] sm:$0xff]
    %v83 = vld [vmem:[#allocation5 + $0x160] sm:$0xff]
    %v84 = vld [vmem:[#allocation5 + $0x168] sm:$0xff]
    %v85 = vld [vmem:[#allocation5 + $0x170] sm:$0xff]
    %v86 = vld [vmem:[#allocation5 + $0x178] sm:$0xff]
    %v87 = vld [vmem:[#allocation5 + $0x180] sm:$0xff]
    %v88 = vld [vmem:[#allocation5 + $0x188] sm:$0xff]
    %v89 = vld [vmem:[#allocation5 + $0x190] sm:$0xff]
    %v90 = vld [vmem:[#allocation5 + $0x198] sm:$0xff]
    %v91 = vld [vmem:[#allocation5 + $0x1a0] sm:$0xff]
    %v92 = vld [vmem:[#allocation5 + $0x1a8] sm:$0xff]
    %v93 = vld [vmem:[#allocation5 + $0x1b0] sm:$0xff]
    %v94 = vld [vmem:[#allocation5 + $0x1b8] sm:$0xff]
    %v95 = vld [vmem:[#allocation5 + $0x1c0] sm:$0xff]
    %v96 = vld [vmem:[#allocation5 + $0x1c8] sm:$0xff]
    %v97 = vld [vmem:[#allocation5 + $0x1d0] sm:$0xff]
    %v98 = vld [vmem:[#allocation5 + $0x1d8] sm:$0xff]
    %v99 = vld [vmem:[#allocation5 + $0x1e0] sm:$0xff]
    %v100 = vld [vmem:[#allocation5 + $0x1e8] sm:$0xff]
    %v101 = vld [vmem:[#allocation5 + $0x1f0] sm:$0xff]
    %v102 = vld [vmem:[#allocation5 + $0x1f8] sm:$0xff]
    %v105 = vunpack.c.l.s4 1983009808
    %v106 = vunpack.c.0.s8 %v105
    %v107 = vlaneseq
    %v108 = vshrl.u32 %v107, 7
    %v109 = vsub.s32 %v106, %v108
    %v110 = vrot.slane %v38, %v109
    %v111 = vcombine.high %v110, %v110
    %114 = vmatprep.subr.mxu0 %v70
    %115 = vmatpush1.msra.mxu0 %v69
    %116 = vmatprep.subr.mxu0 %v68
    %117 = vmatpush1.msra.mxu0 %v67
    %118 = vmatprep.subr.mxu0 %v66
    %119 = vmatpush1.msra.mxu0 %v65
    %120 = vmatprep.subr.mxu0 %v64
    %121 = vmatpush1.msra.mxu0 %v63
    %122 = vmatprep.subr.mxu0 %v62
    %123 = vmatpush1.msra.mxu0 %v61
    %124 = vmatprep.subr.mxu0 %v60
    %125 = vmatpush1.msra.mxu0 %v59
    %126 = vmatprep.subr.mxu0 %v58
    %127 = vmatpush1.msra.mxu0 %v57
    %128 = vmatprep.subr.mxu0 %v56
    %129 = vmatpush1.msra.mxu0 %v55
    %130 = vmatprep.subr.mxu0 %v54
    %131 = vmatpush1.msra.mxu0 %v53
    %132 = vmatprep.subr.mxu0 %v52
    %133 = vmatpush1.msra.mxu0 %v51
    %134 = vmatprep.subr.mxu0 %v50
    %135 = vmatpush1.msra.mxu0 %v49
    %136 = vmatprep.subr.mxu0 %v48
    %137 = vmatpush1.msra.mxu0 %v47
    %138 = vmatprep.subr.mxu0 %v46
    %139 = vmatpush1.msra.mxu0 %v45
    %140 = vmatprep.subr.mxu0 %v44
    %141 = vmatpush1.msra.mxu0 %v43
    %142 = vmatprep.subr.mxu0 %v42
    %143 = vmatpush1.msra.mxu0 %v41
    %144 = vmatprep.subr.mxu0 %v40
    %145 = vmatpush1.msra.mxu0 %v39
    %146 = vmatprep.subr.mxu0 %v102
    %147 = vmatpush2.msra.mxu0 %v101
    %148 = vmatprep.subr.mxu0 %v100
    %149 = vmatpush2.msra.mxu0 %v99
    %150 = vmatprep.subr.mxu0 %v98
    %151 = vmatpush2.msra.mxu0 %v97
    %152 = vmatprep.subr.mxu0 %v96
    %153 = vmatpush2.msra.mxu0 %v95
    %154 = vmatprep.subr.mxu0 %v94
    %155 = vmatpush2.msra.mxu0 %v93
    %156 = vmatprep.subr.mxu0 %v92
    %157 = vmatpush2.msra.mxu0 %v91
    %158 = vmatprep.subr.mxu0 %v90
    %159 = vmatpush2.msra.mxu0 %v89
    %160 = vmatprep.subr.mxu0 %v88
    %161 = vmatpush2.msra.mxu0 %v87
    %162 = vmatprep.subr.mxu0 %v86
    %163 = vmatpush2.msra.mxu0 %v85
    %164 = vmatprep.subr.mxu0 %v84
    %165 = vmatpush2.msra.mxu0 %v83
    %166 = vmatprep.subr.mxu0 %v82
    %167 = vmatpush2.msra.mxu0 %v81
    %168 = vmatprep.subr.mxu0 %v80
    %169 = vmatpush2.msra.mxu0 %v79
    %170 = vmatprep.subr.mxu0 %v78
    %171 = vmatpush2.msra.mxu0 %v77
    %172 = vmatprep.subr.mxu0 %v76
    %173 = vmatpush2.msra.mxu0 %v75
    %174 = vmatprep.subr.mxu0 %v74
    %175 = vmatpush2.msra.mxu0 %v73
    %176 = vmatprep.subr.mxu0 %v72
    %177 = vmatpush2.msra.mxu0 %v71
    %178 = vmatprep.mubr.f32.mxu0 %v111
    %179 = vmatmul.mubr.f32.gmra.mxu0 %v110
    %v180 = vpop.f32.mrf.mxu0
    %v181 = vadd.f32 0.0, %v180
    %v182 = vpop.f32.mrf.mxu0
    %v183 = vadd.f32 0.0, %v182
    %184 = vdwg.mxu0
    %v187 = vcombine.low %v181, %v183
    %v189 = vunpack.c.l.s4 1983009808
    %v190 = vunpack.c.0.s8 %v189
    %v191 = vlaneseq
    %v192 = vshrl.u32 %v191, 7
    %v193 = vsub.s32 %v190, %v192
    %v194 = vrot.slane %v187, %v193
    %196 = vst [vmem:[#allocation7] sm:$0xf] %v194
    // Predicated region
    $region18: #{tpu_custom_call.1} parent=1 // pred_check
      _
    $region19: #{tpu_custom_call.1} parent=1 // pred_check_branch
      %198 = sbr.rel (0) target = $region21
    $region20: #{tpu_custom_call.1} parent=1 // pred_region
      %s200 = ssub.s32 64, 64
      %201 = vsyncadd [#allocation4], %s200
      %s203 = sshll.u32 [#allocation7], 4
      %s204 = int_to_ptr.vmem [resolvable:$true] %s203
      %206 = dma.vmem_to_hbm [thread:$0]  %s204, 64, %s2, [#allocation4]
    $region21: #{tpu_custom_call.1} parent=1 // pred_fallthru
      _
    // Predicated region
    $region22: #{tpu_custom_call.1} parent=1 // pred_check
      _
    $region23: #{tpu_custom_call.1} parent=1 // pred_check_branch
      %208 = sbr.rel (0) target = $region25
    $region24: #{tpu_custom_call.1} parent=1 // pred_region
      %209 = dma.done [#allocation4], 64
    $region25: #{tpu_custom_call.1} parent=1 // pred_fallthru
      _
    %210 = vsyncpa [#allocation3], 1
    %211 = vsyncpa [#allocation6], 1
    %212 = vsyncpa [#allocation4], 1

</llo_original>
